<compile_context>
chip_gen: v7x
topology: tpu7x:2x2x1
jax: 0.10.0
libtpu: 0.0.40
codegen_flags: <defaults>
</compile_context>

<pallas_src>
import functools
import math

import jax
import jax.numpy as jnp
from jax import lax
from jax.experimental import pallas as pl
from jax.experimental.pallas import tpu as pltpu

_LANE = 128
_VMEM_LIMIT = 48 * 1024 * 1024


def _round_up(x, m):
    return ((x + m - 1) // m) * m


# ---------------------------------------------------------------------------
# Kernel 1: "same" 1-D convolution (ConvNorm default path) with fused ReLU
# ---------------------------------------------------------------------------
def _conv1d_kernel(x_hbm, w_ref, b_ref, o_ref, xbuf, sem, *, tl, k, n_l, relu):
    b = pl.program_id(0)
    l = pl.program_id(1)
    halo = tl + k - 1

    def _src(row, ltile):
        return x_hbm.at[row, pl.ds(ltile * tl, halo), :]

    slot = l % 2

    # Prime the pipeline at the first L tile of each batch row.  The L axis is
    # "arbitrary" (sequential), so cross-step prefetch below is safe even when
    # the batch axis is sharded across TensorCores.
    @pl.when(l == 0)
    def _():
        pltpu.make_async_copy(_src(b, 0), xbuf.at[0], sem.at[0]).start()

    # Prefetch next L tile of the same batch row into the other buffer.
    @pl.when(l + 1 < n_l)
    def _():
        pltpu.make_async_copy(_src(b, l + 1), xbuf.at[1 - slot],
                              sem.at[1 - slot]).start()

    # Wait for this tile's halo.
    pltpu.make_async_copy(_src(b, l), xbuf.at[slot], sem.at[slot]).wait()

    xs = xbuf[slot]                                    # (halo, Cin_p)
    if k == 1:
        xc = xs                                        # (tl, Cin_p)
    else:
        # im2col: one (tl, K*Cin_p) x (K*Cin_p, Cout_p) MXU matmul instead of
        # K underfilled (tl, Cin_p) x (Cin_p, Cout_p) dots.
        xc = jnp.concatenate([xs[i:i + tl] for i in range(k)], axis=-1)

    acc = jnp.dot(xc, w_ref[...], preferred_element_type=jnp.float32)
    acc = acc + b_ref[...].astype(jnp.float32)
    if relu:
        acc = jnp.maximum(acc, 0.0)
    o_ref[...] = acc.astype(o_ref.dtype)


def conv1d_same_nlc(x_nlc, weight, bias, *, relu=False, tile_l=256,
                    compute_dtype=jnp.float32, keep_padded_cout=False):
    """ConvNorm.forward (partial=False, norm/cbam=Identity, dropout eval-mode).

    x_nlc:  (B, L, Cin_x) NLC activations (may already carry zero pad channels)
    weight: (Cout, Cin_w, K) PyTorch Conv1d layout, Cin_w <= Cin_x
    bias:   (Cout,)
    Returns (B, L, Cout), or (B, L, Cout_p) with zero extra channels if
    keep_padded_cout (lets chained convs skip slice + re-pad HBM passes).
    """
    B, L, cin_x = x_nlc.shape
    cout, cin_w, K = weight.shape
    assert K % 2 == 1 and cin_w <= cin_x
    pad = (K - 1) // 2

    cin_p = _round_up(cin_x, _LANE)
    cout_p = _round_up(cout, _LANE)     # lane-dense output stores / MXU operands

    tl = _round_up(min(tile_l, L), 8)
    n_l = pl.cdiv(L, tl)
    l_p = n_l * tl
    halo = tl + K - 1

    # Single pad op: 'same' halo along L + channel padding to 128 multiple,
    # cast to the MXU compute dtype (bf16 optional).
    # TODO(synk): the NCL->NLC transpose + this pad are still extra HBM passes;
    # fuse with the producer when embedding in a larger graph.
    x_pad = jnp.pad(
        x_nlc.astype(compute_dtype),
        ((0, 0), (pad, l_p + K - 1 - pad - L), (0, cin_p - cin_x)))

    # (Cout, Cin, K) -> (K*Cin_p, Cout_p): row k*Cin_p + c holds weight[o, c, k].
    w_kco = jnp.transpose(weight, (2, 1, 0))
    w_kco = jnp.pad(w_kco, ((0, 0), (0, cin_p - cin_w), (0, cout_p - cout)))
    w_2d = w_kco.reshape(K * cin_p, cout_p).astype(compute_dtype)
    b_2d = jnp.pad(bias, (0, cout_p - cout)).reshape(1, cout_p).astype(jnp.float32)

    kernel = functools.partial(_conv1d_kernel, tl=tl, k=K, n_l=n_l, relu=relu)

    itemsize = jnp.dtype(compute_dtype).itemsize
    cost = pl.CostEstimate(
        flops=2 * B * l_p * K * cin_p * cout_p,
        transcendentals=0,
        bytes_accessed=x_pad.size * itemsize + w_2d.size * itemsize
        + B * l_p * cout_p * itemsize)

    out = pl.pallas_call(
        kernel,
        out_shape=jax.ShapeDtypeStruct((B, l_p, cout_p), compute_dtype),
        grid_spec=pltpu.PrefetchScalarGridSpec(
            num_scalar_prefetch=0,
            grid=(B, n_l),
            in_specs=[
                pl.BlockSpec(memory_space=pl.ANY),               # x stays in HBM
                pl.BlockSpec((K * cin_p, cout_p), lambda b, l: (0, 0)),  # resident W
                pl.BlockSpec((1, cout_p), lambda b, l: (0, 0)),          # resident bias
            ],
            out_specs=pl.BlockSpec((None, tl, cout_p), lambda b, l: (b, l, 0)),
            scratch_shapes=[
                pltpu.VMEM((2, halo, cin_p), compute_dtype),     # double-buffered halo
                pltpu.SemaphoreType.DMA((2,)),
            ]),
        compiler_params=pltpu.CompilerParams(
            dimension_semantics=("parallel", "arbitrary"),
            vmem_limit_bytes=_VMEM_LIMIT),
        cost_estimate=cost,
    )(x_pad, w_2d, b_2d)

    out = out[:, :L, :]
    if not keep_padded_cout:
        out = out[:, :, :cout]
    return out


# ---------------------------------------------------------------------------
# Kernel 2: L2-distance scores + softmax over the text axis
# ---------------------------------------------------------------------------
def _attn_kernel(q_ref, k_ref, k2_ref, a_ref, lp_ref, *, temperature, t2):
    q = q_ref[...].astype(jnp.float32)                 # (TQ, C)
    k = k_ref[...].astype(jnp.float32)                 # (T2p, C)
    # ||q - k||^2 = |q|^2 + |k|^2 - 2 q.k ; the cross term is one MXU matmul.
    qk = lax.dot_general(q, k, (((1,), (1,)), ((), ())),
                         preferred_element_type=jnp.float32)     # (TQ, T2p)
    q2 = jnp.sum(q * q, axis=-1, keepdims=True)                  # (TQ, 1)
    dist = q2 + k2_ref[...].astype(jnp.float32) - 2.0 * qk
    scores = (-temperature) * dist
    lp_ref[...] = scores.astype(lp_ref.dtype)
    # SafeSoftmax == standard max-subtracted softmax for finite scores;
    # zero-padded key columns are masked out.
    col = lax.broadcasted_iota(jnp.int32, scores.shape, 1)
    masked = jnp.where(col < t2, scores, -1e30)
    m = jnp.max(masked, axis=-1, keepdims=True)
    p = jnp.exp(masked - m)
    a_ref[...] = (p / jnp.sum(p, axis=-1, keepdims=True)).astype(a_ref.dtype)


def attention_dist_softmax(queries_enc, keys_enc, *, temperature, tile_q=256):
    """queries_enc: (B, T1, C); keys_enc: (B, T2, C) -> (attn, scores), (B,T1,T2) f32."""
    B, T1, C = queries_enc.shape
    _, T2, _ = keys_enc.shape

    tq = _round_up(min(tile_q, T1), 8)
    n_t1 = pl.cdiv(T1, tq)
    t1_p = n_t1 * tq
    t2_p = _round_up(T2, _LANE)          # lane-dense output stores

    q_pad = jnp.pad(queries_enc, ((0, 0), (0, t1_p - T1), (0, 0)))
    k_pad = jnp.pad(keys_enc, ((0, 0), (0, t2_p - T2), (0, 0)))
    k2 = jnp.sum(k_pad.astype(jnp.float32) ** 2, axis=-1)[:, None, :]   # (B,1,T2p)

    kernel = functools.partial(_attn_kernel, temperature=float(temperature), t2=T2)
    cost = pl.CostEstimate(
        flops=2 * B * t1_p * t2_p * C,
        transcendentals=B * t1_p * t2_p,
        bytes_accessed=(q_pad.size + k_pad.size) * q_pad.dtype.itemsize
        + 2 * B * t1_p * t2_p * 4)

    attn, scores = pl.pallas_call(
        kernel,
        out_shape=(jax.ShapeDtypeStruct((B, t1_p, t2_p), jnp.float32),
                   jax.ShapeDtypeStruct((B, t1_p, t2_p), jnp.float32)),
        grid_spec=pltpu.PrefetchScalarGridSpec(
            num_scalar_prefetch=0,
            grid=(B, n_t1),
            in_specs=[
                pl.BlockSpec((None, tq, C), lambda b, t: (b, t, 0)),
                pl.BlockSpec((None, t2_p, C), lambda b, t: (b, 0, 0)),  # keys resident
                pl.BlockSpec((None, 1, t2_p), lambda b, t: (b, 0, 0)),
            ],
            out_specs=[pl.BlockSpec((None, tq, t2_p), lambda b, t: (b, t, 0)),
                       pl.BlockSpec((None, tq, t2_p), lambda b, t: (b, t, 0))]),
        compiler_params=pltpu.CompilerParams(
            dimension_semantics=("parallel", "parallel"),
            vmem_limit_bytes=_VMEM_LIMIT),
        cost_estimate=cost,
    )(q_pad, k_pad, k2)

    return attn[:, :T1, :T2], scores[:, :T1, :T2]


# ---------------------------------------------------------------------------
# Full AlignmentEncoder.forward
# ---------------------------------------------------------------------------
def alignment_encoder_forward(params, queries, keys, mask=None, attn_prior=None,
                              conditioning=None, *, temperature=0.0005,
                              tile_l=256, tile_q=256,
                              compute_dtype=jnp.float32):
    """queries: (B, n_mel, T1); keys: (B, n_text, T2) -> (attn, attn_logprob),
    each (B, 1, T1, T2).  Dropout layers run in eval mode (identity)."""
    if conditioning is not None:
        keys = keys + jnp.swapaxes(conditioning, 1, 2)

    # One NCL->NLC transpose per input; everything downstream stays NLC so the
    # channel axis sits on lanes for every kernel (no transpose back needed).
    k_nlc = jnp.swapaxes(keys, 1, 2)
    q_nlc = jnp.swapaxes(queries, 1, 2)

    conv = functools.partial(conv1d_same_nlc, tile_l=tile_l,
                             compute_dtype=compute_dtype)

    (kw1, kb1), (kw2, kb2) = params["key_proj"]
    h = conv(k_nlc, kw1, kb1, relu=True, keep_padded_cout=True)
    keys_enc = conv(h, kw2, kb2, relu=False)                     # (B, T2, n_att)

    (qw1, qb1), (qw2, qb2), (qw3, qb3) = params["query_proj"]
    h = conv(q_nlc, qw1, qb1, relu=True, keep_padded_cout=True)
    h = conv(h, qw2, qb2, relu=True, keep_padded_cout=True)
    queries_enc = conv(h, qw3, qb3, relu=False)                  # (B, T1, n_att)

    attn_plain, scores = attention_dist_softmax(
        queries_enc, keys_enc, temperature=temperature, tile_q=tile_q)

    if attn_prior is not None:
        # TODO(synk): SafeLogSoftmax's +/-inf clamping is a no-op for finite scores.
        logp = jax.nn.log_softmax(scores, axis=-1) + jnp.log(attn_prior + 1e-8)
        attn_logprob = logp
        attn_pre = logp
    else:
        attn_logprob = scores
        attn_pre = scores

    if mask is not None:
        mask_row = mask[:, :, 0][:, None, :]                     # (B, 1, T2)
        attn_pre = jnp.where(mask_row, -1e4, attn_pre)

    if (attn_prior is not None) or (mask is not None):
        attn = jax.nn.softmax(attn_pre, axis=-1)     # rare path kept in plain JAX
    else:
        attn = attn_plain

    return attn[:, None], attn_logprob[:, None]


# ---------------------------------------------------------------------------
# Parameter init (mirrors xavier_uniform_ + default Conv1d bias init)
# ---------------------------------------------------------------------------
def _init_conv_norm(key, in_channels, out_channels, kernel_size, gain):
    kw, kb = jax.random.split(key)
    fan_in = in_channels * kernel_size
    fan_out = out_channels * kernel_size
    w_bound = gain * math.sqrt(6.0 / (fan_in + fan_out))
    weight = jax.random.uniform(kw, (out_channels, in_channels, kernel_size),
                                minval=-w_bound, maxval=w_bound, dtype=jnp.float32)
    b_bound = 1.0 / math.sqrt(fan_in)
    bias = jax.random.uniform(kb, (out_channels,), minval=-b_bound,
                              maxval=b_bound, dtype=jnp.float32)
    return weight, bias


def init_alignment_encoder_params(key, n_mel_channels=80, n_text_channels=512,
                                  n_att_channels=80):
    ks = jax.random.split(key, 5)
    relu_gain = math.sqrt(2.0)    # torch.nn.init.calculate_gain('relu')
    return {
        "key_proj": [
            _init_conv_norm(ks[0], n_text_channels, 2 * n_text_channels, 3, relu_gain),
            _init_conv_norm(ks[1], 2 * n_text_channels, n_att_channels, 1, 1.0),
        ],
        "query_proj": [
            _init_conv_norm(ks[2], n_mel_channels, 2 * n_mel_channels, 3, relu_gain),
            _init_conv_norm(ks[3], 2 * n_mel_channels, n_mel_channels, 1, 1.0),
            _init_conv_norm(ks[4], n_mel_channels, n_att_channels, 1, 1.0),
        ],
    }


# ---------------------------------------------------------------------------
# Pure-JAX reference (mask=None, attn_prior=None path)
# ---------------------------------------------------------------------------
def _reference_forward(params, queries, keys, temperature):
    def conv(x, w, b, relu):
        k = w.shape[-1]
        pad = (k - 1) // 2
        y = lax.conv_general_dilated(x, w, window_strides=(1,),
                                     padding=((pad, pad),),
                                     dimension_numbers=("NCH", "OIH", "NCH"))
        y = y + b[None, :, None]
        return jnp.maximum(y, 0.0) if relu else y

    (kw1, kb1), (kw2, kb2) = params["key_proj"]
    (qw1, qb1), (qw2, qb2), (qw3, qb3) = params["query_proj"]
    keys_enc = conv(conv(keys, kw1, kb1, True), kw2, kb2, False)
    q_enc = conv(conv(conv(queries, qw1, qb1, True), qw2, qb2, True), qw3, qb3, False)
    d = (q_enc[:, :, :, None] - keys_enc[:, :, None, :]) ** 2
    scores = -temperature * jnp.sum(d, axis=1)
    attn = jax.nn.softmax(scores, axis=-1)
    return attn[:, None], scores[:, None]


if __name__ == "__main__":
    root = jax.random.PRNGKey(0)
    kq, kk, kp = jax.random.split(root, 3)

    # TODO(synk): RotaryEmbedding is constructed by the module but never used in
    # forward(); MAS binarization (numba) belongs to get_durations(), not forward().
    B, n_mel, n_text, n_att = 2, 16, 32, 16
    T1, T2 = 19, 12       # deliberately not multiples of 8/128 to exercise padding
    temperature = 0.0005

    queries = jax.random.normal(kq, (B, n_mel, T1), dtype=jnp.float32)
    keys_in = jax.random.normal(kk, (B, n_text, T2), dtype=jnp.float32)
    params = init_alignment_encoder_params(kp, n_mel, n_text, n_att)

    # Small tiles so the tiny demo still walks the multi-tile halo-prefetch
    # path; real speech shapes use the 256 defaults.
    attn, attn_logprob = alignment_encoder_forward(
        params, queries, keys_in, temperature=temperature,
        tile_l=8, tile_q=8, compute_dtype=jnp.float32)
    attn, attn_logprob = jax.block_until_ready((attn, attn_logprob))
    assert attn.shape == (B, 1, T1, T2), attn.shape
    assert attn_logprob.shape == (B, 1, T1, T2), attn_logprob.shape

    ref_attn, ref_logprob = _reference_forward(params, queries, keys_in, temperature)
    assert jnp.allclose(attn, ref_attn, atol=1e-3), "attn mismatch (f32)"
    assert jnp.allclose(attn_logprob, ref_logprob, atol=2e-3), "logprob mismatch (f32)"
    assert jnp.allclose(jnp.sum(attn, axis=-1), 1.0, atol=1e-5)

    # bf16 MXU operands (f32 accumulate) smoke check with loose tolerance.
    attn_bf, logprob_bf = alignment_encoder_forward(
        params, queries, keys_in, temperature=temperature,
        tile_l=8, tile_q=8, compute_dtype=jnp.bfloat16)
    attn_bf, logprob_bf = jax.block_until_ready((attn_bf, logprob_bf))
    assert jnp.allclose(attn_bf, ref_attn, atol=1e-2), "attn mismatch (bf16)"
    assert jnp.allclose(logprob_bf, ref_logprob, atol=1e-2), "logprob mismatch (bf16)"

    print("KERNEL_OK")
</pallas_src>

<mosaic_0001>
module attributes {stable_mosaic.version = 11 : i64} {
  func.func @_conv1d_kernel(%arg0: i32, %arg1: i32, %arg2: memref<2x18x128xf32, #tpu.memory_space<any>>, %arg3: memref<384x128xf32, #tpu.memory_space<vmem>>, %arg4: memref<1x128xf32, #tpu.memory_space<vmem>>, %arg5: memref<1x8x128xf32, #tpu.memory_space<vmem>>, %arg6: memref<2x10x128xf32, #tpu.memory_space<vmem>>, %arg7: memref<2x!tpu.dma_semaphore, #tpu.memory_space<semaphore_mem>>) attributes {dimension_semantics = [#tpu.dimension_semantics<parallel>, #tpu.dimension_semantics<arbitrary>], iteration_bounds = array<i64: 2, 2>, scalar_prefetch = 0 : i64, scratch_operands = 2 : i64, tpu.core_type = #tpu.core_type<tc>, window_params = [{}, {pipeline_mode = #tpu.pipeline_mode<synchronous>, transform_indices = @transform_1, window_bounds = array<i64: 384, 128>}, {pipeline_mode = #tpu.pipeline_mode<synchronous>, transform_indices = @transform_2, window_bounds = array<i64: 1, 128>}, {transform_indices = @transform_3, window_bounds = array<i64: 1, 8, 128>}]} {
    %c2_i32 = arith.constant 2 : i32
    %c0_i32 = arith.constant 0 : i32
    %0 = arith.cmpi eq, %c2_i32, %c0_i32 : i32
    %c1_i32 = arith.constant 1 : i32
    %1 = arith.select %0, %c1_i32, %c2_i32 : i32
    %2 = arith.remsi %arg1, %1 : i32
    %c0_i32_0 = arith.constant 0 : i32
    %3 = arith.cmpi ne, %2, %c0_i32_0 : i32
    %c0_i32_1 = arith.constant 0 : i32
    %4 = arith.cmpi slt, %2, %c0_i32_1 : i32
    %c0_i32_2 = arith.constant 0 : i32
    %5 = arith.cmpi slt, %1, %c0_i32_2 : i32
    %6 = arith.xori %4, %5 : i1
    %7 = arith.andi %6, %3 : i1
    %8 = arith.addi %2, %1 : i32
    %9 = arith.select %7, %8, %2 : i32
    %c0_i32_3 = arith.constant 0 : i32
    %10 = arith.cmpi eq, %arg1, %c0_i32_3 : i32
    %11 = arith.extui %10 : i1 to i32
    %c0_i32_4 = arith.constant 0 : i32
    %12 = arith.cmpi ne, %11, %c0_i32_4 : i32
    scf.if %12 {
      %c0_i32_20 = arith.constant 0 : i32
      %c0_i32_21 = arith.constant 0 : i32
      %c0_i32_22 = arith.constant 0 : i32
      %c0_i32_23 = arith.constant 0 : i32
      %41 = tpu.memref_slice %arg2[%arg0, %c0_i32_22, %c0_i32_23] : memref<2x18x128xf32, #tpu.memory_space<any>> -> memref<1x10x128xf32, #tpu.memory_space<any>>
      %42 = tpu.memref_squeeze %41 : memref<1x10x128xf32, #tpu.memory_space<any>> -> memref<10x128xf32, #tpu.memory_space<any>>
      %c0_i32_24 = arith.constant 0 : i32
      %c0_i32_25 = arith.constant 0 : i32
      %43 = tpu.memref_slice %arg6[%c0_i32_20, %c0_i32_24, %c0_i32_25] : memref<2x10x128xf32, #tpu.memory_space<vmem>> -> memref<1x10x128xf32, #tpu.memory_space<vmem>>
      %44 = tpu.memref_squeeze %43 : memref<1x10x128xf32, #tpu.memory_space<vmem>> -> memref<10x128xf32, #tpu.memory_space<vmem>>
      %45 = tpu.memref_slice %arg7[%c0_i32_21] : memref<2x!tpu.dma_semaphore, #tpu.memory_space<semaphore_mem>> -> memref<1x!tpu.dma_semaphore, #tpu.memory_space<semaphore_mem>>
      %46 = tpu.memref_squeeze %45 : memref<1x!tpu.dma_semaphore, #tpu.memory_space<semaphore_mem>> -> memref<!tpu.dma_semaphore, #tpu.memory_space<semaphore_mem>>
      tpu.enqueue_dma source(%42 : memref<10x128xf32, #tpu.memory_space<any>>) target(%44 : memref<10x128xf32, #tpu.memory_space<vmem>>) target_semaphore(%46 : memref<!tpu.dma_semaphore, #tpu.memory_space<semaphore_mem>>)
    } else {
    }
    %c1_i32_5 = arith.constant 1 : i32
    %13 = arith.addi %arg1, %c1_i32_5 : i32
    %c2_i32_6 = arith.constant 2 : i32
    %14 = arith.cmpi slt, %13, %c2_i32_6 : i32
    %15 = arith.extui %14 : i1 to i32
    %c0_i32_7 = arith.constant 0 : i32
    %16 = arith.cmpi ne, %15, %c0_i32_7 : i32
    scf.if %16 {
      %c1_i32_20 = arith.constant 1 : i32
      %41 = arith.addi %arg1, %c1_i32_20 : i32
      %c8_i32_21 = arith.constant 8 : i32
      %42 = arith.muli %41, %c8_i32_21 : i32
      %c1_i32_22 = arith.constant 1 : i32
      %43 = arith.subi %c1_i32_22, %9 : i32
      %c1_i32_23 = arith.constant 1 : i32
      %44 = arith.subi %c1_i32_23, %9 : i32
      %c0_i32_24 = arith.constant 0 : i32
      %45 = tpu.memref_slice %arg2[%arg0, %42, %c0_i32_24] : memref<2x18x128xf32, #tpu.memory_space<any>> -> memref<1x10x128xf32, #tpu.memory_space<any>>
      %46 = tpu.memref_squeeze %45 : memref<1x10x128xf32, #tpu.memory_space<any>> -> memref<10x128xf32, #tpu.memory_space<any>>
      %c0_i32_25 = arith.constant 0 : i32
      %c0_i32_26 = arith.constant 0 : i32
      %47 = tpu.memref_slice %arg6[%43, %c0_i32_25, %c0_i32_26] : memref<2x10x128xf32, #tpu.memory_space<vmem>> -> memref<1x10x128xf32, #tpu.memory_space<vmem>>
      %48 = tpu.memref_squeeze %47 : memref<1x10x128xf32, #tpu.memory_space<vmem>> -> memref<10x128xf32, #tpu.memory_space<vmem>>
      %49 = tpu.memref_slice %arg7[%44] : memref<2x!tpu.dma_semaphore, #tpu.memory_space<semaphore_mem>> -> memref<1x!tpu.dma_semaphore, #tpu.memory_space<semaphore_mem>>
      %50 = tpu.memref_squeeze %49 : memref<1x!tpu.dma_semaphore, #tpu.memory_space<semaphore_mem>> -> memref<!tpu.dma_semaphore, #tpu.memory_space<semaphore_mem>>
      tpu.enqueue_dma source(%46 : memref<10x128xf32, #tpu.memory_space<any>>) target(%48 : memref<10x128xf32, #tpu.memory_space<vmem>>) target_semaphore(%50 : memref<!tpu.dma_semaphore, #tpu.memory_space<semaphore_mem>>)
    } else {
    }
    %c8_i32 = arith.constant 8 : i32
    %17 = arith.muli %arg1, %c8_i32 : i32
    %c0_i32_8 = arith.constant 0 : i32
    %18 = tpu.memref_slice %arg2[%arg0, %17, %c0_i32_8] : memref<2x18x128xf32, #tpu.memory_space<any>> -> memref<1x10x128xf32, #tpu.memory_space<any>>
    %19 = tpu.memref_squeeze %18 : memref<1x10x128xf32, #tpu.memory_space<any>> -> memref<10x128xf32, #tpu.memory_space<any>>
    %c0_i32_9 = arith.constant 0 : i32
    %c0_i32_10 = arith.constant 0 : i32
    %20 = tpu.memref_slice %arg6[%9, %c0_i32_9, %c0_i32_10] : memref<2x10x128xf32, #tpu.memory_space<vmem>> -> memref<1x10x128xf32, #tpu.memory_space<vmem>>
    %21 = tpu.memref_squeeze %20 : memref<1x10x128xf32, #tpu.memory_space<vmem>> -> memref<10x128xf32, #tpu.memory_space<vmem>>
    %22 = tpu.memref_slice %arg7[%9] : memref<2x!tpu.dma_semaphore, #tpu.memory_space<semaphore_mem>> -> memref<1x!tpu.dma_semaphore, #tpu.memory_space<semaphore_mem>>
    %23 = tpu.memref_squeeze %22 : memref<1x!tpu.dma_semaphore, #tpu.memory_space<semaphore_mem>> -> memref<!tpu.dma_semaphore, #tpu.memory_space<semaphore_mem>>
    tpu.wait_dma2 semaphore(%23 : memref<!tpu.dma_semaphore, #tpu.memory_space<semaphore_mem>>) src(%19 : memref<10x128xf32, #tpu.memory_space<any>>) dst(%21 : memref<10x128xf32, #tpu.memory_space<vmem>>)
    %24 = arith.index_cast %9 : i32 to index
    %c0 = arith.constant 0 : index
    %c0_11 = arith.constant 0 : index
    %25 = vector.load %arg6[%24, %c0, %c0_11] : memref<2x10x128xf32, #tpu.memory_space<vmem>>, vector<1x10x128xf32>
    %26 = vector.shape_cast %25 : vector<1x10x128xf32> to vector<10x128xf32>
    %27 = vector.extract_strided_slice %26 {offsets = [0, 0], sizes = [8, 128], strides = [1, 1]} : vector<10x128xf32> to vector<8x128xf32>
    %28 = vector.extract_strided_slice %26 {offsets = [1, 0], sizes = [8, 128], strides = [1, 1]} : vector<10x128xf32> to vector<8x128xf32>
    %29 = vector.extract_strided_slice %26 {offsets = [2, 0], sizes = [8, 128], strides = [1, 1]} : vector<10x128xf32> to vector<8x128xf32>
    %30 = tpu.concatenate %27, %28, %29 in 1 : vector<8x128xf32>, vector<8x128xf32>, vector<8x128xf32> -> vector<8x384xf32>
    %c0_12 = arith.constant 0 : index
    %c0_13 = arith.constant 0 : index
    %31 = vector.load %arg3[%c0_12, %c0_13] : memref<384x128xf32, #tpu.memory_space<vmem>>, vector<384x128xf32>
    %cst = arith.constant dense<0.000000e+00> : vector<8x128xf32>
    %32 = tpu.matmul %30, %31, %cst {dimension_numbers = #tpu.dot_dimension_numbers<[1], [0], [0], [1], [0, 0, 1, 1], [], []>} : vector<8x384xf32>, vector<384x128xf32>, vector<8x128xf32> -> vector<8x128xf32>
    %c0_14 = arith.constant 0 : index
    %c0_15 = arith.constant 0 : index
    %33 = vector.load %arg4[%c0_14, %c0_15] : memref<1x128xf32, #tpu.memory_space<vmem>>, vector<1x128xf32>
    %34 = vector.broadcast %33 : vector<1x128xf32> to vector<8x128xf32>
    %35 = arith.addf %32, %34 : vector<8x128xf32>
    %cst_16 = arith.constant 0.000000e+00 : f32
    %36 = vector.broadcast %cst_16 : f32 to vector<8x128xf32>
    %37 = arith.maximumf %35, %36 : vector<8x128xf32>
    %c0_17 = arith.constant 0 : index
    %c0_18 = arith.constant 0 : index
    %c0_19 = arith.constant 0 : index
    %38 = vector.load %arg5[%c0_17, %c0_18, %c0_19] : memref<1x8x128xf32, #tpu.memory_space<vmem>>, vector<1x8x128xf32>
    %39 = vector.shape_cast %38 : vector<1x8x128xf32> to vector<8x128xf32>
    %40 = vector.shape_cast %37 : vector<8x128xf32> to vector<1x8x128xf32>
    tpu.vector_store %arg5[%c0_17, %c0_18, %c0_19], %40 {strides = array<i32>} : memref<1x8x128xf32, #tpu.memory_space<vmem>>, vector<1x8x128xf32>,
    return
  }
  func.func @transform_1(%arg0: i32, %arg1: i32) -> (i32, i32) {
    %c0_i32 = arith.constant 0 : i32
    %c0_i32_0 = arith.constant 0 : i32
    %c0_i32_1 = arith.constant 0 : i32
    return %c0_i32, %c0_i32_0 : i32, i32
  }
  func.func @transform_2(%arg0: i32, %arg1: i32) -> (i32, i32) {
    %c0_i32 = arith.constant 0 : i32
    %c0_i32_0 = arith.constant 0 : i32
    %c0_i32_1 = arith.constant 0 : i32
    return %c0_i32, %c0_i32_0 : i32, i32
  }
  func.func @transform_3(%arg0: i32, %arg1: i32) -> (i32, i32, i32) {
    %c0_i32 = arith.constant 0 : i32
    %c0_i32_0 = arith.constant 0 : i32
    return %arg0, %arg1, %c0_i32 : i32, i32, i32
  }
}

</mosaic_0001>

<llo_original>
// kernel: tpu_custom_call.1
$region0: #{tpu_custom_call.1}
  #allocation0 [shape = 'u32[]', space=smem, size = 0x4, offset = 0x4, fixed_abs, tag = 'smem constant byte address 0x4 - core index']
  #allocation1 [shape = 'u32[144,128]{1,0:T(1,128)}', space=vmem, size = 0x12000, scoped, tag = 'internal scratch']
  #allocation2 [shape = 'f32[2,10,128]{2,1,0:T(8,128)}', space=vmem, size = 0x4000, scoped, tag = 'scratch operand']
  #allocation3 [shape = 's32[2]{0}', space=sflag, size = 0x8, scoped, tag = 'scratch operand']
  #allocation8 [shape = 's32[]', space=sflag, size = 0x4, offset = 0, fixed_abs, tag = 'sflag constant byte address 0x0 - dummy sync flag']
  #allocation9 [shape = 's32[]', space=sflag, size = 0x4, offset = 0, fixed_abs, tag = 'sflag constant byte address 0x0 - dummy sync flag']
  %s0 = inlined_call_operand.vmem [shape: f32[2,18,128], index: 0, kind: input, shape index: {}]
  %s1 = inlined_call_operand.hbm [shape: f32[384,128], index: 1, kind: input, shape index: {}]
  %s2 = inlined_call_operand.vmem [shape: f32[1,128], index: 2, kind: input, shape index: {}]
  %s3 = inlined_call_operand.hbm [shape: f32[2,16,128], index: 3, kind: output, shape index: {}]
  %s4 = sld [smem:[#allocation0]]
  $region127: #{tpu_custom_call.1} parent=0
    _
  %s6 = ssub.s32 1, %s4
  %s7 = scalar_select 0, %s6, %s4
  $region1: #{tpu_custom_call.1} parent=0
    #allocation4 [shape = 'u8[196608]{0}', space=vmem, size = 0x30000, scoped, tag = 'input window, operand 1, single buffered']
    #allocation5 [shape = 's32[2]{0}', space=sflag, size = 0x8, scoped, tag = 'scoped memory for tpu_custom_call.1']
    #allocation6 [shape = 's32[2]{0}', space=sflag, size = 0x8, scoped, tag = 'scoped memory for tpu_custom_call.1']
    #allocation7 [shape = 'u8[8192]{0}', space=vmem, size = 0x2000, scoped, tag = 'output window, operand 0']
    %8 = vsyncpa [#allocation5], 0
    %9 = vsyncpa [#allocation6], 0
    %s10 = scalar_lea.sflag [#allocation6], 1
    %11 = vsyncpa %s10, 0
    loop: start=0, step=1, limit=6
    $region2: #{tpu_custom_call.1} parent=1 // loop_pre_header
      _
    $region3: #{tpu_custom_call.1} parent=1 // loop_header
      %s13 = sphi 0, %s17
      %p14 = scmp.ge.s32.totalorder %s13, 6
      %s20 = sphi 0, %s32
      %s21 = sphi 0, %s28
      %s22 = sphi 0, %s20
      %s23 = sphi 0, %s21
      %s24 = sphi 0, %s22
      %s25 = sphi 0, %s23
      %s33 = sphi 0, %s33
      %s35 = sphi 0, %s33
      %s36 = sphi 0, %s35
      %s50 = sphi 0, %s36
      %s54 = sphi 0, %s54
      %s56 = sphi 0, %s54
      %s57 = sphi 0, %s56
      %s71 = sphi 0, %s57
      %s79 = sphi 0, %s81
      %s82 = sphi 0, %s79
      %s83 = sphi 0, %s82
      %s99 = sphi 0, %s83
    $region4: #{tpu_custom_call.1} parent=1 // loop_header_branch
      %16 = sbr.rel (%p14) target = $region8
    $region5: #{tpu_custom_call.1} parent=1 // loop_body
      %s18 = ssub.s32 %s13, 1
      %s19 = ssub.s32 %s13, 2
      %s26 = sadd.s32 1, %s21
      %p27 = scmp.ge.s32.totalorder %s26, 2
      %s28 = scalar_select %p27, 0, %s26
      %s29 = sadd.s32 1, %s20
      %s30 = scalar_select %p27, %s29, %s20
      %p31 = scmp.ge.s32.totalorder %s30, 2
      %s32 = scalar_select %p31, 0, %s30
      %s34 = sadd.s32 %s33, 1
      %p37 = scmp.eq.s32.totalorder %s13, 3
      %p38 = scmp.ne.s32.totalorder %s33, %s35
      %p39 = scmp.eq.s32.totalorder %s13, 0
      %p40 = por %p38, %p39
      %p41 = scmp.ne.s32.totalorder %s33, %s35
      %p42 = scmp.eq.s32.totalorder %s18, 3
      %p43 = por %p41, %p42
      %p44 = scmp.ne.s32.totalorder %s35, %s36
      %p45 = scmp.eq.s32.totalorder %s18, 0
      %p46 = por %p44, %p45
      %p47 = scmp.ne.s32.totalorder %s35, %s36
      %p48 = scmp.eq.s32.totalorder %s19, 3
      %p49 = por %p47, %p48
      %p51 = scmp.ne.s32.totalorder %s36, %s50
      %p52 = scmp.eq.s32.totalorder %s19, 0
      %p53 = por %p51, %p52
      %s55 = sadd.s32 %s54, 1
      %p58 = scmp.eq.s32.totalorder %s13, 3
      %p59 = scmp.ne.s32.totalorder %s54, %s56
      %p60 = scmp.eq.s32.totalorder %s13, 0
      %p61 = por %p59, %p60
      %p62 = scmp.ne.s32.totalorder %s54, %s56
      %p63 = scmp.eq.s32.totalorder %s18, 3
      %p64 = por %p62, %p63
      %p65 = scmp.ne.s32.totalorder %s56, %s57
      %p66 = scmp.eq.s32.totalorder %s18, 0
      %p67 = por %p65, %p66
      %p68 = scmp.ne.s32.totalorder %s56, %s57
      %p69 = scmp.eq.s32.totalorder %s19, 3
      %p70 = por %p68, %p69
      %p72 = scmp.ne.s32.totalorder %s57, %s71
      %p73 = scmp.eq.s32.totalorder %s19, 0
      %p74 = por %p72, %p73
      %s75 = ssub.s32 %s20, %s32
      %s76 = ssub.s32 %s21, %s28
      %s77 = sor.u32 %s75, %s76
      %p78 = scmp.eq.s32.totalorder %s77, 0
      %s80 = sadd.s32 %s79, 1
      %s81 = scalar_select %p78, %s79, %s80
      %p84 = pneg %p78
      %p85 = scmp.eq.s32.totalorder %s13, 3
      %p86 = por %p84, %p85
      %p87 = scmp.ne.s32.totalorder %s79, %s82
      %p88 = scmp.eq.s32.totalorder %s13, 0
      %p89 = por %p87, %p88
      %p90 = scmp.ne.s32.totalorder %s79, %s82
      %p91 = scmp.eq.s32.totalorder %s18, 3
      %p92 = por %p90, %p91
      %p93 = scmp.ne.s32.totalorder %s82, %s83
      %p94 = scmp.eq.s32.totalorder %s18, 0
      %p95 = por %p93, %p94
      %p96 = scmp.ne.s32.totalorder %s82, %s83
      %p97 = scmp.eq.s32.totalorder %s19, 3
      %p98 = por %p96, %p97
      %p100 = scmp.ne.s32.totalorder %s83, %s99
      %p101 = scmp.eq.s32.totalorder %s19, 0
      %p102 = por %p100, %p101
      %p103 = scmp.le.s32.totalorder 1, %s13
      %p104 = scmp.lt.s32.totalorder %s13, 5
      %p105 = pnand %p103, %p104
      %p106 = pneg %p105
      // Predicated region
      $region9: #{tpu_custom_call.1} parent=5 // pred_check
        _
      $region10: #{tpu_custom_call.1} parent=5 // pred_check_branch
        %108 = sbr.rel (%p105) target = $region12
      $region11: #{tpu_custom_call.1} parent=5 // pred_region
        %s109 = ssub.s32 %s13, 1
        // Predicated region
        $region13: #{tpu_custom_call.1} parent=11 // pred_check
          %p110 = pneg %p46
        $region14: #{tpu_custom_call.1} parent=11 // pred_check_branch
          %112 = sbr.rel (%p110) target = $region16
        $region15: #{tpu_custom_call.1} parent=11 // pred_region
          %s114 = ssub.s32 6144, 6144
          %115 = vsyncadd [#allocation5], %s114
          %s116 = sshll.u32 [#allocation4], 4
          %s117 = int_to_ptr.vmem [resolvable:$true] %s116
          %122 = dma.hbm_to_vmem [thread:$0]  %s1, 6144, %s117, [#allocation5], 128, 128, 8
        $region16: #{tpu_custom_call.1} parent=11 // pred_fallthru
          _
        // Predicated region
        $region17: #{tpu_custom_call.1} parent=11 // pred_check
          %p123 = pneg %p67
        $region18: #{tpu_custom_call.1} parent=11 // pred_check_branch
          %125 = sbr.rel (%p123) target = $region20
        $region19: #{tpu_custom_call.1} parent=11 // pred_region
          _
        $region20: #{tpu_custom_call.1} parent=11 // pred_fallthru
          _
      $region12: #{tpu_custom_call.1} parent=5 // pred_fallthru
        _
      %p126 = scmp.lt.s32.totalorder %s13, 4
      // Predicated region
      $region21: #{tpu_custom_call.1} parent=5 // pred_check
        %p127 = pneg %p126
      $region22: #{tpu_custom_call.1} parent=5 // pred_check_branch
        %129 = sbr.rel (%p127) target = $region24
      $region23: #{tpu_custom_call.1} parent=5 // pred_region
        _
      $region24: #{tpu_custom_call.1} parent=5 // pred_fallthru
        _
      %p130 = scmp.le.s32.totalorder 1, %s13
      %p131 = scmp.lt.s32.totalorder %s13, 5
      %p132 = pnand %p130, %p131
      %p133 = pneg %p132
      // Predicated region
      $region25: #{tpu_custom_call.1} parent=5 // pred_check
        _
      $region26: #{tpu_custom_call.1} parent=5 // pred_check_branch
        %135 = sbr.rel (%p132) target = $region28
      $region27: #{tpu_custom_call.1} parent=5 // pred_region
        %s136 = ssub.s32 %s13, 1
        // Predicated region
        $region29: #{tpu_custom_call.1} parent=27 // pred_check
          %p137 = pneg %p46
        $region30: #{tpu_custom_call.1} parent=27 // pred_check_branch
          %139 = sbr.rel (%p137) target = $region32
        $region31: #{tpu_custom_call.1} parent=27 // pred_region
          %140 = dma.done [#allocation5], 6144
        $region32: #{tpu_custom_call.1} parent=27 // pred_fallthru
          _
        %p141 = pneg %p46
        %p142 = pneg %p43
        %p143 = pneg %p67
        %p144 = pneg %p64
        %p145 = pneg %p95
        %p146 = pneg %p92
        %s147 = sand.u32 %s82, 1
        %s148 = scalar_lea.sflag [#allocation6], %s147
        %s149 = sand.u32 %s82, 1
        %s150 = smul.addr %s149, 8
        %s151 = scalar_lea.vmem [#allocation7], %s150
        %p152 = scmp.lt.s32.totalorder %s23, 0
        %s153 = ssub.s32 0, %s23
        %s154 = scalar_select %p152, %s153, %s23
        %s155 = sand.u32 %s154, 1
        %s156 = ssub.s32 0, %s155
        %s157 = scalar_select %p152, %s156, %s155
        %p158 = scmp.ne.s32.totalorder %s157, 0
        %p159 = scmp.lt.s32.totalorder %s157, 0
        %p160 = pnand %p159, %p158
        %p161 = pneg %p160
        %s162 = sadd.s32 %s157, 2
        %s163 = scalar_select %p161, %s162, %s157
        %p164 = scmp.eq.s32.totalorder %s23, 0
        // Predicated region
        $region33: #{tpu_custom_call.1} parent=27 // pred_check
          %p165 = pneg %p164
        $region34: #{tpu_custom_call.1} parent=27 // pred_check_branch
          %167 = sbr.rel (%p165) target = $region36
        $region35: #{tpu_custom_call.1} parent=27 // pred_region
          %s168 = smul.u32 %s22, 24
          %s169 = scalar_lea.vmem %s0, %s168
          %p171 = scmp.lt.u32.totalorder 10, 8
          %p172 = pneg %p171
          // Predicated region
          $region37: #{tpu_custom_call.1} parent=35 // pred_check
            _
          $region38: #{tpu_custom_call.1} parent=35 // pred_check_branch
            %174 = sbr.rel (%p171) target = $region40
          $region39: #{tpu_custom_call.1} parent=35 // pred_region
            %s189 = sand.u32 10, 7
            %p190 = scmp.eq.s32.totalorder %s189, 0
            %p191 = pneg %p190
            // Predicated region
            $region52: #{tpu_custom_call.1} parent=39 // pred_check
              _
            $region53: #{tpu_custom_call.1} parent=39 // pred_check_branch
              %193 = sbr.rel (%p190) target = $region55
            $region54: #{tpu_custom_call.1} parent=39 // pred_region
              %s194 = sand.u32 10, 7
              %s195 = ssub.s32 10, %s194
              %s196 = scalar_lea.vmem %s169, %s195
              %s197 = ssub.s32 10, %s194
              %s198 = scalar_lea.vmem [#allocation2], %s197
              loop: start=0, step=1, limit=1
              $region56: #{tpu_custom_call.1} parent=54 // loop_pre_header
                _
              $region57: #{tpu_custom_call.1} parent=54 // loop_header
                %s200 = sphi 0, %s204
                %p201 = scmp.ge.s32.totalorder %s200, 1
                %s205 = sphi %s169, %s169
                %s206 = sphi [#allocation2], [#allocation2]
              $region58: #{tpu_custom_call.1} parent=54 // loop_header_branch
                %203 = sbr.rel (%p201) target = $region62
              $region59: #{tpu_custom_call.1} parent=54 // loop_body
                %v207 = vld [vmem:[%s205] sm:$0xff]
                %208 = vst [vmem:[%s206] sm:$0xff] %v207
              $region60: #{tpu_custom_call.1} parent=54 // loop_footer
                %s204 = sadd.s32 1, %s200
              $region61: #{tpu_custom_call.1} parent=54 // loop_footer_branch
                %199 = sbr.rel target = $region57
              $region62: #{tpu_custom_call.1} parent=54 // loop_exit
                _
              %s209 = sshllo.u32 0, %s194
              loop: start=0, step=1, limit=1
              $region63: #{tpu_custom_call.1} parent=54 // loop_pre_header
                _
              $region64: #{tpu_custom_call.1} parent=54 // loop_header
                %s211 = sphi 0, %s215
                %p212 = scmp.ge.s32.totalorder %s211, 1
                %s216 = sphi %s196, %s196
                %s217 = sphi %s198, %s198
              $region65: #{tpu_custom_call.1} parent=54 // loop_header_branch
                %214 = sbr.rel (%p212) target = $region69
              $region66: #{tpu_custom_call.1} parent=54 // loop_body
                %v218 = vld [vmem:[%s216] sm:%s209]
                %219 = vst [vmem:[%s217] sm:%s209] %v218
              $region67: #{tpu_custom_call.1} parent=54 // loop_footer
                %s215 = sadd.s32 1, %s211
              $region68: #{tpu_custom_call.1} parent=54 // loop_footer_branch
                %210 = sbr.rel target = $region64
              $region69: #{tpu_custom_call.1} parent=54 // loop_exit
                _
            $region55: #{tpu_custom_call.1} parent=39 // pred_fallthru
              _
          $region40: #{tpu_custom_call.1} parent=35 // pred_fallthru
            _
          // Predicated region
          $region41: #{tpu_custom_call.1} parent=35 // pred_check
            %p175 = pneg %p171
          $region42: #{tpu_custom_call.1} parent=35 // pred_check_branch
            %177 = sbr.rel (%p175) target = $region44
          $region43: #{tpu_custom_call.1} parent=35 // pred_region
            %s178 = sshllo.u32 0, 10
            loop: start=0, step=1, limit=1
            $region45: #{tpu_custom_call.1} parent=43 // loop_pre_header
              _
            $region46: #{tpu_custom_call.1} parent=43 // loop_header
              %s180 = sphi 0, %s184
              %p181 = scmp.ge.s32.totalorder %s180, 1
              %s185 = sphi %s169, %s169
              %s186 = sphi [#allocation2], [#allocation2]
            $region47: #{tpu_custom_call.1} parent=43 // loop_header_branch
              %183 = sbr.rel (%p181) target = $region51
            $region48: #{tpu_custom_call.1} parent=43 // loop_body
              %v187 = vld [vmem:[%s185] sm:%s178]
              %188 = vst [vmem:[%s186] sm:%s178] %v187
            $region49: #{tpu_custom_call.1} parent=43 // loop_footer
              %s184 = sadd.s32 1, %s180
            $region50: #{tpu_custom_call.1} parent=43 // loop_footer_branch
              %179 = sbr.rel target = $region46
            $region51: #{tpu_custom_call.1} parent=43 // loop_exit
              _
          $region44: #{tpu_custom_call.1} parent=35 // pred_fallthru
            _
          // Predicated region
          $region70: #{tpu_custom_call.1} parent=35 // pred_check
            _
          $region71: #{tpu_custom_call.1} parent=35 // pred_check_branch
            %222 = sbr.rel (0) target = $region73
          $region72: #{tpu_custom_call.1} parent=35 // pred_region
            %223 = vsyncadd [#allocation3], 160
          $region73: #{tpu_custom_call.1} parent=35 // pred_fallthru
            _
        $region36: #{tpu_custom_call.1} parent=27 // pred_fallthru
          _
        %s224 = sadd.s32 %s23, 1
        %p225 = scmp.lt.s32.totalorder %s224, 2
        // Predicated region
        $region74: #{tpu_custom_call.1} parent=27 // pred_check
          %p226 = pneg %p225
        $region75: #{tpu_custom_call.1} parent=27 // pred_check_branch
          %228 = sbr.rel (%p226) target = $region77
        $region76: #{tpu_custom_call.1} parent=27 // pred_region
          %s229 = smul.u32 %s224, 8
          %s230 = ssub.s32 1, %s163
          %s231 = smul.u32 %s22, 24
          %s232 = sadd.s32 %s229, %s231
          %s233 = scalar_lea.vmem %s0, %s232
          %s234 = smul.u32 %s230, 16
          %s235 = scalar_lea.vmem [#allocation2], %s234
          %s236 = scalar_lea.sflag [#allocation3], %s230
          %p238 = scmp.lt.u32.totalorder 10, 8
          %p239 = pneg %p238
          // Predicated region
          $region78: #{tpu_custom_call.1} parent=76 // pred_check
            _
          $region79: #{tpu_custom_call.1} parent=76 // pred_check_branch
            %241 = sbr.rel (%p238) target = $region81
          $region80: #{tpu_custom_call.1} parent=76 // pred_region
            %s256 = sand.u32 10, 7
            %p257 = scmp.eq.s32.totalorder %s256, 0
            %p258 = pneg %p257
            // Predicated region
            $region93: #{tpu_custom_call.1} parent=80 // pred_check
              _
            $region94: #{tpu_custom_call.1} parent=80 // pred_check_branch
              %260 = sbr.rel (%p257) target = $region96
            $region95: #{tpu_custom_call.1} parent=80 // pred_region
              %s261 = sand.u32 10, 7
              %s262 = ssub.s32 10, %s261
              %s263 = scalar_lea.vmem %s233, %s262
              %s264 = ssub.s32 10, %s261
              %s265 = scalar_lea.vmem %s235, %s264 [#allocation2]
              loop: start=0, step=1, limit=1
              $region97: #{tpu_custom_call.1} parent=95 // loop_pre_header
                _
              $region98: #{tpu_custom_call.1} parent=95 // loop_header
                %s267 = sphi 0, %s271
                %p268 = scmp.ge.s32.totalorder %s267, 1
                %s272 = sphi %s233, %s233
                %s273 = sphi %s235, %s235
              $region99: #{tpu_custom_call.1} parent=95 // loop_header_branch
                %270 = sbr.rel (%p268) target = $region103
              $region100: #{tpu_custom_call.1} parent=95 // loop_body
                %v274 = vld [vmem:[%s272] sm:$0xff]
                %275 = vst [vmem:[%s273] sm:$0xff] %v274
              $region101: #{tpu_custom_call.1} parent=95 // loop_footer
                %s271 = sadd.s32 1, %s267
              $region102: #{tpu_custom_call.1} parent=95 // loop_footer_branch
                %266 = sbr.rel target = $region98
              $region103: #{tpu_custom_call.1} parent=95 // loop_exit
                _
              %s276 = sshllo.u32 0, %s261
              loop: start=0, step=1, limit=1
              $region104: #{tpu_custom_call.1} parent=95 // loop_pre_header
                _
              $region105: #{tpu_custom_call.1} parent=95 // loop_header
                %s278 = sphi 0, %s282
                %p279 = scmp.ge.s32.totalorder %s278, 1
                %s283 = sphi %s263, %s263
                %s284 = sphi %s265, %s265
              $region106: #{tpu_custom_call.1} parent=95 // loop_header_branch
                %281 = sbr.rel (%p279) target = $region110
              $region107: #{tpu_custom_call.1} parent=95 // loop_body
                %v285 = vld [vmem:[%s283] sm:%s276]
                %286 = vst [vmem:[%s284] sm:%s276] %v285
              $region108: #{tpu_custom_call.1} parent=95 // loop_footer
                %s282 = sadd.s32 1, %s278
              $region109: #{tpu_custom_call.1} parent=95 // loop_footer_branch
                %277 = sbr.rel target = $region105
              $region110: #{tpu_custom_call.1} parent=95 // loop_exit
                _
            $region96: #{tpu_custom_call.1} parent=80 // pred_fallthru
              _
          $region81: #{tpu_custom_call.1} parent=76 // pred_fallthru
            _
          // Predicated region
          $region82: #{tpu_custom_call.1} parent=76 // pred_check
            %p242 = pneg %p238
          $region83: #{tpu_custom_call.1} parent=76 // pred_check_branch
            %244 = sbr.rel (%p242) target = $region85
          $region84: #{tpu_custom_call.1} parent=76 // pred_region
            %s245 = sshllo.u32 0, 10
            loop: start=0, step=1, limit=1
            $region86: #{tpu_custom_call.1} parent=84 // loop_pre_header
              _
            $region87: #{tpu_custom_call.1} parent=84 // loop_header
              %s247 = sphi 0, %s251
              %p248 = scmp.ge.s32.totalorder %s247, 1
              %s252 = sphi %s233, %s233
              %s253 = sphi %s235, %s235
            $region88: #{tpu_custom_call.1} parent=84 // loop_header_branch
              %250 = sbr.rel (%p248) target = $region92
            $region89: #{tpu_custom_call.1} parent=84 // loop_body
              %v254 = vld [vmem:[%s252] sm:%s245]
              %255 = vst [vmem:[%s253] sm:%s245] %v254
            $region90: #{tpu_custom_call.1} parent=84 // loop_footer
              %s251 = sadd.s32 1, %s247
            $region91: #{tpu_custom_call.1} parent=84 // loop_footer_branch
              %246 = sbr.rel target = $region87
            $region92: #{tpu_custom_call.1} parent=84 // loop_exit
              _
          $region85: #{tpu_custom_call.1} parent=76 // pred_fallthru
            _
          // Predicated region
          $region111: #{tpu_custom_call.1} parent=76 // pred_check
            _
          $region112: #{tpu_custom_call.1} parent=76 // pred_check_branch
            %289 = sbr.rel (0) target = $region114
          $region113: #{tpu_custom_call.1} parent=76 // pred_region
            %290 = vsyncadd %s236, 160
          $region114: #{tpu_custom_call.1} parent=76 // pred_fallthru
            _
        $region77: #{tpu_custom_call.1} parent=27 // pred_fallthru
          _
        %s291 = smul.u32 %s163, 16
        %s292 = scalar_lea.vmem [#allocation2], %s291
        %s293 = scalar_lea.sflag [#allocation3], %s163
        %s294 = smul.u32 10, 1
        %s295 = sshll.u32 %s294, 4
        %296 = dma.done %s293, %s295
        %v297 = vld [vmem:[%s292] sm:$0xff]
        %v298 = vld [vmem:[%s292 + $0x8] sm:$0x3]
        %vm301 = vcmask 1046528
        %v302 = vrot.slane %v297, 1
        %v303 = vrot.slane %v298, 1
        %v304 = vsel %vm301, %v302, %v303
        %vm306 = vcmask 1045504
        %v307 = vrot.slane %v297, 2
        %v308 = vrot.slane %v298, 2
        %v309 = vsel %vm306, %v307, %v308
        %v311 = vld [vmem:[#allocation4] sm:$0xff]
        %v312 = vld [vmem:[#allocation4 + $0x8] sm:$0xff]
        %v313 = vld [vmem:[#allocation4 + $0x10] sm:$0xff]
        %v314 = vld [vmem:[#allocation4 + $0x18] sm:$0xff]
        %v315 = vld [vmem:[#allocation4 + $0x20] sm:$0xff]
        %v316 = vld [vmem:[#allocation4 + $0x28] sm:$0xff]
        %v317 = vld [vmem:[#allocation4 + $0x30] sm:$0xff]
        %v318 = vld [vmem:[#allocation4 + $0x38] sm:$0xff]
        %v319 = vld [vmem:[#allocation4 + $0x40] sm:$0xff]
        %v320 = vld [vmem:[#allocation4 + $0x48] sm:$0xff]
        %v321 = vld [vmem:[#allocation4 + $0x50] sm:$0xff]
        %v322 = vld [vmem:[#allocation4 + $0x58] sm:$0xff]
        %v323 = vld [vmem:[#allocation4 + $0x60] sm:$0xff]
        %v324 = vld [vmem:[#allocation4 + $0x68] sm:$0xff]
        %v325 = vld [vmem:[#allocation4 + $0x70] sm:$0xff]
        %v326 = vld [vmem:[#allocation4 + $0x78] sm:$0xff]
        %v327 = vld [vmem:[#allocation4 + $0x80] sm:$0xff]
        %v328 = vld [vmem:[#allocation4 + $0x88] sm:$0xff]
        %v329 = vld [vmem:[#allocation4 + $0x90] sm:$0xff]
        %v330 = vld [vmem:[#allocation4 + $0x98] sm:$0xff]
        %v331 = vld [vmem:[#allocation4 + $0xa0] sm:$0xff]
        %v332 = vld [vmem:[#allocation4 + $0xa8] sm:$0xff]
        %v333 = vld [vmem:[#allocation4 + $0xb0] sm:$0xff]
        %v334 = vld [vmem:[#allocation4 + $0xb8] sm:$0xff]
        %v335 = vld [vmem:[#allocation4 + $0xc0] sm:$0xff]
        %v336 = vld [vmem:[#allocation4 + $0xc8] sm:$0xff]
        %v337 = vld [vmem:[#allocation4 + $0xd0] sm:$0xff]
        %v338 = vld [vmem:[#allocation4 + $0xd8] sm:$0xff]
        %v339 = vld [vmem:[#allocation4 + $0xe0] sm:$0xff]
        %v340 = vld [vmem:[#allocation4 + $0xe8] sm:$0xff]
        %v341 = vld [vmem:[#allocation4 + $0xf0] sm:$0xff]
        %v342 = vld [vmem:[#allocation4 + $0xf8] sm:$0xff]
        %v343 = vld [vmem:[#allocation4 + $0x100] sm:$0xff]
        %v344 = vld [vmem:[#allocation4 + $0x108] sm:$0xff]
        %v345 = vld [vmem:[#allocation4 + $0x110] sm:$0xff]
        %v346 = vld [vmem:[#allocation4 + $0x118] sm:$0xff]
        %v347 = vld [vmem:[#allocation4 + $0x120] sm:$0xff]
        %v348 = vld [vmem:[#allocation4 + $0x128] sm:$0xff]
        %v349 = vld [vmem:[#allocation4 + $0x130] sm:$0xff]
        %v350 = vld [vmem:[#allocation4 + $0x138] sm:$0xff]
        %v351 = vld [vmem:[#allocation4 + $0x140] sm:$0xff]
        %v352 = vld [vmem:[#allocation4 + $0x148] sm:$0xff]
        %v353 = vld [vmem:[#allocation4 + $0x150] sm:$0xff]
        %v354 = vld [vmem:[#allocation4 + $0x158] sm:$0xff]
        %v355 = vld [vmem:[#allocation4 + $0x160] sm:$0xff]
        %v356 = vld [vmem:[#allocation4 + $0x168] sm:$0xff]
        %v357 = vld [vmem:[#allocation4 + $0x170] sm:$0xff]
        %v358 = vld [vmem:[#allocation4 + $0x178] sm:$0xff]
        %v359 = vld [vmem:[%s2] sm:$0x1]
        %v361 = vlaneseq
        %v362 = vshrl.u32 %v361, 7
        %v363 = vsub.s32 0, %v362
        %v364 = vrot.slane %v359, %v363
        %366 = vmatprep.subr.mxu0 0.0
        %367 = vmatpush1.msra.mxu0 %v311
        %368 = vmatprep.subr.mxu0 0.0
        %369 = vmatpush1.msra.mxu0 %v312
        %370 = vmatprep.subr.mxu0 0.0
        %371 = vmatpush1.msra.mxu0 %v313
        %372 = vmatprep.subr.mxu0 0.0
        %373 = vmatpush1.msra.mxu0 %v314
        %374 = vmatprep.subr.mxu0 0.0
        %375 = vmatpush1.msra.mxu0 %v315
        %376 = vmatprep.subr.mxu0 0.0
        %377 = vmatpush1.msra.mxu0 %v316
        %378 = vmatprep.subr.mxu0 0.0
        %379 = vmatpush1.msra.mxu0 %v317
        %380 = vmatprep.subr.mxu0 0.0
        %381 = vmatpush1.msra.mxu0 %v318
        %382 = vmatprep.subr.mxu0 0.0
        %383 = vmatpush1.msra.mxu0 %v319
        %384 = vmatprep.subr.mxu0 0.0
        %385 = vmatpush1.msra.mxu0 %v320
        %386 = vmatprep.subr.mxu0 0.0
        %387 = vmatpush1.msra.mxu0 %v321
        %388 = vmatprep.subr.mxu0 0.0
        %389 = vmatpush1.msra.mxu0 %v322
        %390 = vmatprep.subr.mxu0 0.0
        %391 = vmatpush1.msra.mxu0 %v323
        %392 = vmatprep.subr.mxu0 0.0
        %393 = vmatpush1.msra.mxu0 %v324
        %394 = vmatprep.subr.mxu0 0.0
        %395 = vmatpush1.msra.mxu0 %v325
        %396 = vmatprep.subr.mxu0 0.0
        %397 = vmatpush1.msra.mxu0 %v326
        %398 = vmatprep.subr.mxu0 0.0
        %399 = vmatpush1.msra.mxu0 %v327
        %400 = vmatprep.subr.mxu0 0.0
        %401 = vmatpush1.msra.mxu0 %v328
        %402 = vmatprep.subr.mxu0 0.0
        %403 = vmatpush1.msra.mxu0 %v329
        %404 = vmatprep.subr.mxu0 0.0
        %405 = vmatpush1.msra.mxu0 %v330
        %406 = vmatprep.subr.mxu0 0.0
        %407 = vmatpush1.msra.mxu0 %v331
        %408 = vmatprep.subr.mxu0 0.0
        %409 = vmatpush1.msra.mxu0 %v332
        %410 = vmatprep.subr.mxu0 0.0
        %411 = vmatpush1.msra.mxu0 %v333
        %412 = vmatprep.subr.mxu0 0.0
        %413 = vmatpush1.msra.mxu0 %v334
        %414 = vmatprep.subr.mxu0 0.0
        %415 = vmatpush1.msra.mxu0 %v335
        %416 = vmatprep.subr.mxu0 0.0
        %417 = vmatpush1.msra.mxu0 %v336
        %418 = vmatprep.subr.mxu0 0.0
        %419 = vmatpush1.msra.mxu0 %v337
        %420 = vmatprep.subr.mxu0 0.0
        %421 = vmatpush1.msra.mxu0 %v338
        %422 = vmatprep.subr.mxu0 0.0
        %423 = vmatpush1.msra.mxu0 %v339
        %424 = vmatprep.subr.mxu0 0.0
        %425 = vmatpush1.msra.mxu0 %v340
        %426 = vmatprep.subr.mxu0 0.0
        %427 = vmatpush1.msra.mxu0 %v341
        %428 = vmatprep.subr.mxu0 0.0
        %429 = vmatpush1.msra.mxu0 %v342
        %430 = vmatprep.mubr.f32.mxu0 %v304
        %431 = vmatmul.mubr.f32.gmra.mrb[0].mxu0 %v297
        %v432 = vpop.f32.mrb[0].mxu0
        %v433 = vadd.f32 %v364, %v432
        %v434 = vpop.f32.mrb[0].mxu0
        %435 = vdwg.mxu0
        %436 = vmatprep.subr.mxu0 0.0
        %437 = vmatpush1.msra.mxu0 %v343
        %438 = vmatprep.subr.mxu0 0.0
        %439 = vmatpush1.msra.mxu0 %v344
        %440 = vmatprep.subr.mxu0 0.0
        %441 = vmatpush1.msra.mxu0 %v345
        %442 = vmatprep.subr.mxu0 0.0
        %443 = vmatpush1.msra.mxu0 %v346
        %444 = vmatprep.subr.mxu0 0.0
        %445 = vmatpush1.msra.mxu0 %v347
        %446 = vmatprep.subr.mxu0 0.0
        %447 = vmatpush1.msra.mxu0 %v348
        %448 = vmatprep.subr.mxu0 0.0
        %449 = vmatpush1.msra.mxu0 %v349
        %450 = vmatprep.subr.mxu0 0.0
        %451 = vmatpush1.msra.mxu0 %v350
        %452 = vmatprep.subr.mxu0 0.0
        %453 = vmatpush1.msra.mxu0 %v351
        %454 = vmatprep.subr.mxu0 0.0
        %455 = vmatpush1.msra.mxu0 %v352
        %456 = vmatprep.subr.mxu0 0.0
        %457 = vmatpush1.msra.mxu0 %v353
        %458 = vmatprep.subr.mxu0 0.0
        %459 = vmatpush1.msra.mxu0 %v354
        %460 = vmatprep.subr.mxu0 0.0
        %461 = vmatpush1.msra.mxu0 %v355
        %462 = vmatprep.subr.mxu0 0.0
        %463 = vmatpush1.msra.mxu0 %v356
        %464 = vmatprep.subr.mxu0 0.0
        %465 = vmatpush1.msra.mxu0 %v357
        %466 = vmatprep.subr.mxu0 0.0
        %467 = vmatpush1.msra.mxu0 %v358
        %468 = vmatprep.subr.mxu0 0.0
        %469 = vmatpush1.msra.mxu0 0.0
        %470 = vmatprep.subr.mxu0 0.0
        %471 = vmatpush1.msra.mxu0 0.0
        %472 = vmatprep.subr.mxu0 0.0
        %473 = vmatpush1.msra.mxu0 0.0
        %474 = vmatprep.subr.mxu0 0.0
        %475 = vmatpush1.msra.mxu0 0.0
        %476 = vmatprep.subr.mxu0 0.0
        %477 = vmatpush1.msra.mxu0 0.0
        %478 = vmatprep.subr.mxu0 0.0
        %479 = vmatpush1.msra.mxu0 0.0
        %480 = vmatprep.subr.mxu0 0.0
        %481 = vmatpush1.msra.mxu0 0.0
        %482 = vmatprep.subr.mxu0 0.0
        %483 = vmatpush1.msra.mxu0 0.0
        %484 = vmatprep.subr.mxu0 0.0
        %485 = vmatpush1.msra.mxu0 0.0
        %486 = vmatprep.subr.mxu0 0.0
        %487 = vmatpush1.msra.mxu0 0.0
        %488 = vmatprep.subr.mxu0 0.0
        %489 = vmatpush1.msra.mxu0 0.0
        %490 = vmatprep.subr.mxu0 0.0
        %491 = vmatpush1.msra.mxu0 0.0
        %492 = vmatprep.subr.mxu0 0.0
        %493 = vmatpush1.msra.mxu0 0.0
        %494 = vmatprep.subr.mxu0 0.0
        %495 = vmatpush1.msra.mxu0 0.0
        %496 = vmatprep.subr.mxu0 0.0
        %497 = vmatpush1.msra.mxu0 0.0
        %498 = vmatprep.subr.mxu0 0.0
        %499 = vmatpush1.msra.mxu0 0.0
        %500 = vmatprep.mubr.f32.mxu0 0.0
        %501 = vmatmul.mubr.f32.gmra.mrb[0].mxu0 %v309
        %v502 = vpop.f32.mrb[0].mxu0
        %v503 = vadd.f32 %v433, %v502
        %v504 = vpop.f32.mrb[0].mxu0
        %505 = vdwg.mxu0
        %v506 = vmax.f32 %v503, 0.0
        %507 = vst [vmem:[%s151] sm:$0xff] %v506
        %s508 = sand.u32 %s82, 1
        %s509 = scalar_lea.sflag [#allocation6], %s508
        %s510 = sand.u32 %s82, 1
        %s511 = smul.addr %s510, 8
        %s512 = scalar_lea.vmem [#allocation7], %s511
        // Predicated region
        $region115: #{tpu_custom_call.1} parent=27 // pred_check
          %p513 = pneg %p92
        $region116: #{tpu_custom_call.1} parent=27 // pred_check_branch
          %515 = sbr.rel (%p513) target = $region118
        $region117: #{tpu_custom_call.1} parent=27 // pred_region
          %s517 = ssub.s32 128, 128
          %518 = vsyncadd %s509, %s517
          %s519 = smul.addr %s22, 2
          %s520 = sadd.s32 %s23, %s519
          %s521 = smul.addr %s520, 128
          %s522 = scalar_lea.hbm %s3, %s521
          %s524 = sshll.u32 %s512, 4
          %s525 = int_to_ptr.vmem [resolvable:$true] %s524
          %527 = dma.vmem_to_hbm [thread:$0]  %s525, 128, %s522, %s509
        $region118: #{tpu_custom_call.1} parent=27 // pred_fallthru
          _
      $region28: #{tpu_custom_call.1} parent=5 // pred_fallthru
        _
      %p528 = scmp.le.s32.totalorder 2, %s13
      // Predicated region
      $region119: #{tpu_custom_call.1} parent=5 // pred_check
        %p529 = pneg %p528
      $region120: #{tpu_custom_call.1} parent=5 // pred_check_branch
        %531 = sbr.rel (%p529) target = $region122
      $region121: #{tpu_custom_call.1} parent=5 // pred_region
        %s532 = ssub.s32 %s13, 2
        // Predicated region
        $region123: #{tpu_custom_call.1} parent=121 // pred_check
          %p533 = pneg %p98
        $region124: #{tpu_custom_call.1} parent=121 // pred_check_branch
          %535 = sbr.rel (%p533) target = $region126
        $region125: #{tpu_custom_call.1} parent=121 // pred_region
          %s536 = sand.u32 %s83, 1
          %s537 = scalar_lea.sflag [#allocation6], %s536
          %s538 = sand.u32 %s83, 1
          %s539 = smul.addr %s538, 8
          %s540 = scalar_lea.vmem [#allocation7], %s539
          %541 = dma.done %s537, 128
        $region126: #{tpu_custom_call.1} parent=121 // pred_fallthru
          _
      $region122: #{tpu_custom_call.1} parent=5 // pred_fallthru
        _
    $region6: #{tpu_custom_call.1} parent=1 // loop_footer
      %s17 = sadd.s32 1, %s13
    $region7: #{tpu_custom_call.1} parent=1 // loop_footer_branch
      %12 = sbr.rel target = $region3
    $region8: #{tpu_custom_call.1} parent=1 // loop_exit
      _
    %542 = vsyncpa [#allocation5], 1
    %s543 = scalar_lea.sflag [#allocation5], 1
    %544 = vsyncpa %s543, 1
    %545 = vsyncpa [#allocation6], 1
    %s546 = scalar_lea.sflag [#allocation6], 1
    %547 = vsyncpa %s546, 1
  %548 = vsyncmov [#allocation3]
  %s549 = vpop.sfrf %548
  %p550 = scmp.eq.s32.totalorder %s549, 0
  %p551 = pneg %p550
  %553 = shalt.err (%p551)
  %s554 = scalar_lea.sflag [#allocation3], 1
  %555 = vsyncmov %s554
  %s556 = vpop.sfrf %555
  %p557 = scmp.eq.s32.totalorder %s556, 0
  %p558 = pneg %p557
  %560 = shalt.err (%p558)

</llo_original>
